<compile_context>
chip_gen: v7x
topology: tpu7x:2x2x1
jax: 0.10.0
libtpu: 0.0.40
codegen_flags: <defaults>
</compile_context>

<pallas_src>
import functools
import math

import jax
import jax.numpy as jnp
from jax.experimental import pallas as pl
from jax.experimental.pallas import tpu as pltpu


_EPS = 1e-6


@functools.lru_cache(maxsize=None)
def _vmem_limit_bytes():
    """~48 MiB on v7x (64 MiB VMEM/TC), ~96 MiB on v5e/v6e (128 MiB)."""
    cap = 64 * 1024 * 1024
    try:
        info = pltpu.get_tpu_info()
        cap = int(getattr(info, "vmem_capacity_bytes", cap) or cap)
    except Exception:
        pass
    return min(int(cap * 3 // 4), 112 * 1024 * 1024)


def _cparams(dims):
    return pltpu.CompilerParams(dimension_semantics=dims,
                                vmem_limit_bytes=_vmem_limit_bytes())


def _tile(dim, target, align):
    """Largest `align`-aligned divisor of `dim` that is <= target, else the full dim."""
    if dim <= target:
        return dim
    t = (target // align) * align
    while t >= align:
        if dim % t == 0:
            return t
        t -= align
    # TODO(synk): add a pad-and-mask path for dims with no aligned divisor; the full-dim
    # fallback can exceed VMEM for large prime-ish dims.
    return dim


# --------------------------- tiled matmul (MXU) ------------------------------

def matmul_kernel(x_ref, w_ref, o_ref, acc_ref):
    @pl.when(pl.program_id(2) == 0)
    def _():
        acc_ref[...] = jnp.zeros_like(acc_ref)

    acc_ref[...] += jnp.dot(x_ref[...], w_ref[...],
                            preferred_element_type=jnp.float32)

    @pl.when(pl.program_id(2) == pl.num_programs(2) - 1)
    def _():
        o_ref[...] = acc_ref[...].astype(o_ref.dtype)


def matmul_residual_kernel(x_ref, w_ref, r_ref, o_ref, acc_ref):
    """Same as matmul_kernel but the finalize fuses the residual add: o = r + x@w."""
    @pl.when(pl.program_id(2) == 0)
    def _():
        acc_ref[...] = jnp.zeros_like(acc_ref)

    acc_ref[...] += jnp.dot(x_ref[...], w_ref[...],
                            preferred_element_type=jnp.float32)

    @pl.when(pl.program_id(2) == pl.num_programs(2) - 1)
    def _():
        o_ref[...] = (r_ref[...] + acc_ref[...]).astype(o_ref.dtype)


def run_matmul(x, w, residual=None, out_dtype=jnp.float32, tm_target=512):
    """y = x @ w (+ residual), bf16 operands on the MXU, fp32 VMEM accumulator."""
    x = x.astype(jnp.bfloat16)          # no-op: activations are produced as bf16
    w = w.astype(jnp.bfloat16)          # no-op: weights pre-cast by prepare_params
    M, K = x.shape
    _, N = w.shape
    tm = _tile(M, tm_target, 16)        # 16 = bf16 sublane pair
    tn = _tile(N, 512, 128)
    tk = _tile(K, 1024, 256)
    grid = (M // tm, N // tn, K // tk)
    x_spec = pl.BlockSpec((tm, tk), lambda i, j, k: (i, k))
    w_spec = pl.BlockSpec((tk, tn), lambda i, j, k: (k, j))
    o_spec = pl.BlockSpec((tm, tn), lambda i, j, k: (i, j))
    scratch = [pltpu.VMEM((tm, tn), jnp.float32)]
    cp = _cparams(("parallel", "parallel", "arbitrary"))
    # TODO(synk): consider pipeline_mode=pl.Buffered(3) on the weight spec for long-K matmuls.
    if residual is None:
        return pl.pallas_call(
            matmul_kernel,
            out_shape=jax.ShapeDtypeStruct((M, N), out_dtype),
            grid=grid, in_specs=[x_spec, w_spec], out_specs=o_spec,
            scratch_shapes=scratch, compiler_params=cp,
        )(x, w)
    r_spec = pl.BlockSpec((tm, tn), lambda i, j, k: (i, j))   # resident across the K sweep
    return pl.pallas_call(
        matmul_residual_kernel,
        out_shape=jax.ShapeDtypeStruct((M, N), out_dtype),
        grid=grid, in_specs=[x_spec, w_spec, r_spec], out_specs=o_spec,
        scratch_shapes=scratch, compiler_params=cp,
    )(x, w, residual)


# --------------------- fused gate/up projection + SwiGLU ---------------------

def mlp_gate_kernel(x_ref, w1_ref, w2_ref, g_ref, acc1_ref, acc2_ref):
    @pl.when(pl.program_id(2) == 0)
    def _():
        acc1_ref[...] = jnp.zeros_like(acc1_ref)
        acc2_ref[...] = jnp.zeros_like(acc2_ref)

    x = x_ref[...]
    acc1_ref[...] += jnp.dot(x, w1_ref[...], preferred_element_type=jnp.float32)
    acc2_ref[...] += jnp.dot(x, w2_ref[...], preferred_element_type=jnp.float32)

    @pl.when(pl.program_id(2) == pl.num_programs(2) - 1)
    def _():
        a = acc1_ref[...]
        g_ref[...] = (a * jax.nn.sigmoid(a) * acc2_ref[...]).astype(g_ref.dtype)


def run_mlp_gate(x, w1, w2):
    """silu(x@w1) * (x@w2) in one pass; no (M,H) fp32 intermediates hit HBM."""
    x = x.astype(jnp.bfloat16)
    M, K = x.shape
    _, N = w1.shape
    tm = _tile(M, 512, 16)
    tn = _tile(N, 512, 128)
    tk = _tile(K, 1024, 256)
    grid = (M // tm, N // tn, K // tk)
    return pl.pallas_call(
        mlp_gate_kernel,
        out_shape=jax.ShapeDtypeStruct((M, N), jnp.bfloat16),
        grid=grid,
        in_specs=[pl.BlockSpec((tm, tk), lambda i, j, k: (i, k)),
                  pl.BlockSpec((tk, tn), lambda i, j, k: (k, j)),
                  pl.BlockSpec((tk, tn), lambda i, j, k: (k, j))],
        out_specs=pl.BlockSpec((tm, tn), lambda i, j, k: (i, j)),
        scratch_shapes=[pltpu.VMEM((tm, tn), jnp.float32),
                        pltpu.VMEM((tm, tn), jnp.float32)],
        compiler_params=_cparams(("parallel", "parallel", "arbitrary")),
    )(x, w1, w2)


# ------------------------------ RMSNorm kernel -------------------------------

def rmsnorm_kernel(x_ref, w_ref, h_ref):
    x = x_ref[...]
    inv = jax.lax.rsqrt(jnp.mean(x * x, axis=-1, keepdims=True) + _EPS)
    h_ref[...] = (x * inv * w_ref[...]).astype(h_ref.dtype)


def run_rmsnorm(x, w):
    """fp32 residual in, bf16 normalized activations out (for the next matmul)."""
    M, D = x.shape
    tm = _tile(M, 512, 16)
    return pl.pallas_call(
        rmsnorm_kernel,
        out_shape=jax.ShapeDtypeStruct((M, D), jnp.bfloat16),
        grid=(M // tm,),
        in_specs=[pl.BlockSpec((tm, D), lambda i: (i, 0)),
                  pl.BlockSpec((1, D), lambda i: (0, 0))],
        out_specs=pl.BlockSpec((tm, D), lambda i: (i, 0)),
        compiler_params=_cparams(("parallel",)),
    )(x, w)


# -------------------- flash attention (RoPE + causal softmax) ----------------

def attention_kernel(q_ref, k_ref, v_ref, cq_ref, sq_ref, ck_ref, sk_ref,
                     ctx_ref, m_sc, l_sc, acc_sc, *, num_heads, head_dim, tq, tk):
    qi = pl.program_id(1)
    ki = pl.program_id(2)
    half = head_dim // 2
    D = num_heads * head_dim

    @pl.when(ki == 0)
    def _():
        m_sc[...] = jnp.full_like(m_sc[...], -1e30)
        l_sc[...] = jnp.zeros_like(l_sc[...])
        acc_sc[...] = jnp.zeros_like(acc_sc[...])

    # Skip KV tiles that lie entirely above the causal diagonal.
    @pl.when(ki * tk <= qi * tq + (tq - 1))
    def _():
        def split_heads(slab):                       # (rows, D) -> (H, rows, Dh)
            rows = slab.shape[0]
            return jnp.swapaxes(slab.reshape(rows, num_heads, head_dim), 0, 1)

        def rope(t, cos, sin):                       # t (H, rows, Dh); cos/sin (rows, Dh)
            rot = jnp.concatenate([t[..., half:], t[..., :half]], axis=-1)
            return t * cos[None] + rot * sin[None]

        q = rope(split_heads(q_ref[0]).astype(jnp.float32), cq_ref[...], sq_ref[...])
        k = rope(split_heads(k_ref[0]).astype(jnp.float32), ck_ref[...], sk_ref[...])
        v = split_heads(v_ref[0])                    # bf16 for the PV matmul

        scale = 1.0 / math.sqrt(head_dim)
        s = jnp.einsum("hqd,hkd->hqk", q.astype(jnp.bfloat16), k.astype(jnp.bfloat16),
                       preferred_element_type=jnp.float32) * scale        # (H, tq, tk)
        row = qi * tq + jax.lax.broadcasted_iota(jnp.int32, (tq, tk), 0)
        col = ki * tk + jax.lax.broadcasted_iota(jnp.int32, (tq, tk), 1)
        mask = (col <= row)[None]

        m_prev = m_sc[...]                                                  # (H, tq, 1)
        m_new = jnp.maximum(m_prev,
                            jnp.max(jnp.where(mask, s, -1e30), axis=-1, keepdims=True))
        p = jnp.where(mask, jnp.exp(s - m_new), 0.0)
        alpha = jnp.exp(m_prev - m_new)
        l_sc[...] = alpha * l_sc[...] + jnp.sum(p, axis=-1, keepdims=True)
        acc_sc[...] = alpha * acc_sc[...] + jnp.einsum(
            "hqk,hkd->hqd", p.astype(jnp.bfloat16), v,
            preferred_element_type=jnp.float32)
        m_sc[...] = m_new

    @pl.when(ki == pl.num_programs(2) - 1)
    def _():
        out = acc_sc[...] * pl.reciprocal(l_sc[...], approx=True)          # (H, tq, Dh)
        # lane-dense (tq, D) context slab for the out-projection matmul
        ctx_ref[0] = jnp.swapaxes(out, 0, 1).reshape(tq, D).astype(ctx_ref.dtype)


def run_attention(qkv, cos2, sin2, num_heads):
    """qkv: (B, T, 3D) bf16 (Q|K|V column blocks). Returns context (B, T, D) bf16."""
    B, T, threeD = qkv.shape
    D = threeD // 3
    Dh = D // num_heads
    assert D % 128 == 0, "attention kernel expects model dim to be a multiple of 128"
    tq = _tile(T, 256, 16)
    tk = _tile(T, 256, 16)
    nq, nk = T // tq, T // tk
    kernel = functools.partial(attention_kernel, num_heads=num_heads,
                               head_dim=Dh, tq=tq, tk=tk)
    return pl.pallas_call(
        kernel,
        out_shape=jax.ShapeDtypeStruct((B, T, D), jnp.bfloat16),
        grid=(B, nq, nk),
        in_specs=[pl.BlockSpec((1, tq, D), lambda b, qi, ki: (b, qi, 0)),   # Q cols
                  pl.BlockSpec((1, tk, D), lambda b, qi, ki: (b, ki, 1)),   # K cols
                  pl.BlockSpec((1, tk, D), lambda b, qi, ki: (b, ki, 2)),   # V cols
                  pl.BlockSpec((tq, Dh), lambda b, qi, ki: (qi, 0)),        # cos (q rows)
                  pl.BlockSpec((tq, Dh), lambda b, qi, ki: (qi, 0)),        # sin (q rows)
                  pl.BlockSpec((tk, Dh), lambda b, qi, ki: (ki, 0)),        # cos (k rows)
                  pl.BlockSpec((tk, Dh), lambda b, qi, ki: (ki, 0))],       # sin (k rows)
        out_specs=pl.BlockSpec((1, tq, D), lambda b, qi, ki: (b, qi, 0)),
        scratch_shapes=[pltpu.VMEM((num_heads, tq, 1), jnp.float32),
                        pltpu.VMEM((num_heads, tq, 1), jnp.float32),
                        pltpu.VMEM((num_heads, tq, Dh), jnp.float32)],
        compiler_params=_cparams(("parallel", "parallel", "arbitrary")),
    )(qkv, qkv, qkv, cos2, sin2, cos2, sin2)


# -------------------- present K/V (RoPE'd K, raw V) as bf16 -------------------

def rope_kv_kernel(k_ref, v_ref, ck_ref, sk_ref, ko_ref, vo_ref, *, num_heads, head_dim):
    half = head_dim // 2
    kslab = k_ref[0]
    vslab = v_ref[0]
    rows = kslab.shape[0]
    k = jnp.swapaxes(kslab.reshape(rows, num_heads, head_dim), 0, 1).astype(jnp.float32)
    v = jnp.swapaxes(vslab.reshape(rows, num_heads, head_dim), 0, 1)
    rot = jnp.concatenate([k[..., half:], k[..., :half]], axis=-1)
    k = k * ck_ref[...][None] + rot * sk_ref[...][None]
    ko_ref[0] = k.astype(ko_ref.dtype)
    vo_ref[0] = v.astype(vo_ref.dtype)


def run_rope_kv(qkv, cos2, sin2, num_heads):
    """Writes present (k, v) caches (B, H, T, Dh) bf16 exactly once per layer."""
    B, T, threeD = qkv.shape
    D = threeD // 3
    Dh = D // num_heads
    assert D % 128 == 0
    tk = _tile(T, 256, 16)
    kernel = functools.partial(rope_kv_kernel, num_heads=num_heads, head_dim=Dh)
    return pl.pallas_call(
        kernel,
        out_shape=(jax.ShapeDtypeStruct((B, num_heads, T, Dh), jnp.bfloat16),
                   jax.ShapeDtypeStruct((B, num_heads, T, Dh), jnp.bfloat16)),
        grid=(B, T // tk),
        in_specs=[pl.BlockSpec((1, tk, D), lambda b, ki: (b, ki, 1)),       # K cols
                  pl.BlockSpec((1, tk, D), lambda b, ki: (b, ki, 2)),       # V cols
                  pl.BlockSpec((tk, Dh), lambda b, ki: (ki, 0)),
                  pl.BlockSpec((tk, Dh), lambda b, ki: (ki, 0))],
        out_specs=(pl.BlockSpec((1, num_heads, tk, Dh), lambda b, ki: (b, 0, ki, 0)),
                   pl.BlockSpec((1, num_heads, tk, Dh), lambda b, ki: (b, 0, ki, 0))),
        compiler_params=_cparams(("parallel", "parallel")),
    )(qkv, qkv, cos2, sin2)


# ------------------------------- forward pass --------------------------------

def rope_tables(seq_len, head_dim):
    """Full-width tables: cos2 = [cos|cos], sin2 = [-sin|sin] (sign folded in)."""
    inv_freq = 1.0 / (10000.0 ** (jnp.arange(0, head_dim, 2, dtype=jnp.float32)
                                  / head_dim))
    pos = jnp.arange(seq_len, dtype=jnp.float32)[:, None]
    freqs = pos * inv_freq[None, :]
    sin, cos = jnp.sin(freqs), jnp.cos(freqs)
    cos2 = jnp.concatenate([cos, cos], axis=-1)
    sin2 = jnp.concatenate([-sin, sin], axis=-1)
    return cos2, sin2


def prepare_params(params):
    """One-time weight fusion + bf16 cast (outside the per-forward path)."""
    out = dict(embed=params["embed"].astype(jnp.float32),
               norm=params["norm"].astype(jnp.float32),
               lm=params["lm"].astype(jnp.bfloat16),
               layers=[])
    for lp in params["layers"]:
        out["layers"].append(dict(
            n1=lp["n1"].astype(jnp.float32),
            n2=lp["n2"].astype(jnp.float32),
            wqkv=jnp.concatenate([lp["wq"], lp["wk"], lp["wv"]],
                                 axis=1).astype(jnp.bfloat16),
            wo=lp["wo"].astype(jnp.bfloat16),
            w1=lp["w1"].astype(jnp.bfloat16),
            w2=lp["w2"].astype(jnp.bfloat16),
            w3=lp["w3"].astype(jnp.bfloat16),
        ))
    return out


def llama_forward(input_ids, params, num_heads):
    """params must come from prepare_params (fused / bf16 weights)."""
    B, T = input_ids.shape
    D = params["embed"].shape[1]
    Dh = D // num_heads
    V = params["lm"].shape[1]
    M = B * T

    cos2, sin2 = rope_tables(T, Dh)

    # Embedding gather is glue (plain JAX); all dense / attention math is in kernels.
    x = params["embed"][input_ids].astype(jnp.float32).reshape(M, D)

    layers = params["layers"]
    h = run_rmsnorm(x, layers[0]["n1"])                         # bf16 activations
    presents = []
    for i, lp in enumerate(layers):
        qkv = run_matmul(h, lp["wqkv"], out_dtype=jnp.bfloat16)  # (M, 3D) bf16
        qkv = qkv.reshape(B, T, 3 * D)                           # free row-major reshape

        ctx = run_attention(qkv, cos2, sin2, num_heads)          # (B, T, D) bf16
        pk, pv = run_rope_kv(qkv, cos2, sin2, num_heads)         # (B, H, T, Dh) bf16
        presents.append((pk, pv))

        x = run_matmul(ctx.reshape(M, D), lp["wo"], residual=x)  # fused residual add, fp32
        m = run_rmsnorm(x, lp["n2"])                             # bf16
        g = run_mlp_gate(m, lp["w1"], lp["w2"])                  # fused w1/w2 + SwiGLU, bf16
        x = run_matmul(g, lp["w3"], residual=x)                  # fused residual add, fp32

        # next norm (next layer's norm1 or the final norm) fused right after the residual
        next_w = layers[i + 1]["n1"] if i + 1 < len(layers) else params["norm"]
        h = run_rmsnorm(x, next_w)

    logits = run_matmul(h, params["lm"], out_dtype=jnp.float32,
                        tm_target=1024).reshape(B, T, V)         # vocab-tiled lm_head
    return logits, presents


# --------------------------- reference (pure JAX) ----------------------------

def ref_forward(input_ids, params, num_heads):
    x = params["embed"][input_ids]
    B, T, D = x.shape
    hd = D // num_heads
    inv_freq = 1.0 / (10000.0 ** (jnp.arange(0, hd, 2, dtype=jnp.float32) / hd))
    pos = jnp.arange(T, dtype=jnp.float32)[:, None]
    freqs = pos * inv_freq[None, :]
    sin, cos = jnp.sin(freqs), jnp.cos(freqs)

    def rms(t, w):
        return t / jnp.sqrt(jnp.mean(t * t, -1, keepdims=True) + _EPS) * w[0]

    def rope(t):
        t1, t2 = t[..., :hd // 2], t[..., hd // 2:]
        return jnp.concatenate([t1 * cos - t2 * sin, t1 * sin + t2 * cos], -1)

    presents = []
    for lp in params["layers"]:
        h = rms(x, lp["n1"])
        q = (h @ lp["wq"]).reshape(B, T, num_heads, hd).transpose(0, 2, 1, 3)
        k = (h @ lp["wk"]).reshape(B, T, num_heads, hd).transpose(0, 2, 1, 3)
        v = (h @ lp["wv"]).reshape(B, T, num_heads, hd).transpose(0, 2, 1, 3)
        q, k = rope(q), rope(k)
        presents.append((k, v))
        scores = jnp.einsum("bhqd,bhkd->bhqk", q, k) / math.sqrt(hd)
        mask = jnp.tril(jnp.ones((T, T)))
        scores = jnp.where(mask == 0, -jnp.inf, scores)
        attn = jax.nn.softmax(scores, axis=-1)
        out = jnp.einsum("bhqk,bhkd->bhqd", attn, v)
        out = out.transpose(0, 2, 1, 3).reshape(B, T, D)
        x = x + out @ lp["wo"]
        m = rms(x, lp["n2"])
        a, b = m @ lp["w1"], m @ lp["w2"]
        x = x + (a * jax.nn.sigmoid(a) * b) @ lp["w3"]
    x = rms(x, params["norm"])
    return x @ params["lm"], presents


# --------------------------------- setup -------------------------------------

def init_params(key, vocab, dim, num_layers, mult=4):
    hidden = dim * mult
    keys = iter(jax.random.split(key, 2 + num_layers * 7))

    def nrm(shape):
        return jax.random.normal(next(keys), shape, jnp.float32) * 0.02

    layers = []
    for _ in range(num_layers):
        layers.append(dict(
            n1=jnp.ones((1, dim), jnp.float32),
            wq=nrm((dim, dim)), wk=nrm((dim, dim)),
            wv=nrm((dim, dim)), wo=nrm((dim, dim)),
            n2=jnp.ones((1, dim), jnp.float32),
            w1=nrm((dim, hidden)), w2=nrm((dim, hidden)), w3=nrm((hidden, dim)),
        ))
    return dict(embed=nrm((vocab, dim)), layers=layers,
                norm=jnp.ones((1, dim), jnp.float32), lm=nrm((dim, vocab)))


# TODO(synk): past_key_values (incremental decode cache) path is not exercised here
# (matches the PyTorch module's past_key_values=None case); present K/V caches are
# produced (bf16) and returned.  Dropout is identity (p=0.0) as in the module default.

if __name__ == "__main__":
    VOCAB, DIM, HEADS, LAYERS = 256, 128, 4, 2
    B, T = 2, 8
    HEAD_DIM = DIM // HEADS

    key = jax.random.PRNGKey(0)
    kp, kd = jax.random.split(key)
    raw_params = init_params(kp, VOCAB, DIM, LAYERS)
    params = prepare_params(raw_params)          # one-time fuse + bf16 cast
    input_ids = jax.random.randint(kd, (B, T), 0, VOCAB, dtype=jnp.int32)

    logits, presents = llama_forward(input_ids, params, HEADS)
    logits = jax.block_until_ready(logits)
    presents = jax.block_until_ready(presents)

    # correctness check against a pure-JAX fp32 reference of the PyTorch forward
    ref_logits, ref_presents = ref_forward(input_ids, raw_params, HEADS)
    assert logits.shape == (B, T, VOCAB)
    assert jnp.allclose(logits, ref_logits, rtol=2e-2, atol=2e-2), "logits mismatch"
    for (pk, pv), (rk, rv) in zip(presents, ref_presents):
        assert pk.shape == (B, HEADS, T, HEAD_DIM)
        assert jnp.allclose(pk.astype(jnp.float32), rk, rtol=2e-2, atol=2e-2), "present-k mismatch"
        assert jnp.allclose(pv.astype(jnp.float32), rv, rtol=2e-2, atol=2e-2), "present-v mismatch"

    print("KERNEL_OK")
</pallas_src>

<mosaic_0001>
module attributes {stable_mosaic.version = 11 : i64} {
  func.func @rmsnorm_kernel(%arg0: i32, %arg1: memref<16x128xf32, #tpu.memory_space<vmem>>, %arg2: memref<1x128xf32, #tpu.memory_space<vmem>>, %arg3: memref<16x128xbf16, #tpu.memory_space<vmem>>) attributes {dimension_semantics = [#tpu.dimension_semantics<parallel>], iteration_bounds = array<i64: 1>, scalar_prefetch = 0 : i64, scratch_operands = 0 : i64, tpu.core_type = #tpu.core_type<tc>, window_params = [{transform_indices = @transform_0, window_bounds = array<i64: 16, 128>}, {pipeline_mode = #tpu.pipeline_mode<synchronous>, transform_indices = @transform_1, window_bounds = array<i64: 1, 128>}, {transform_indices = @transform_2, window_bounds = array<i64: 16, 128>}]} {
    %c0 = arith.constant 0 : index
    %c0_0 = arith.constant 0 : index
    %0 = vector.load %arg1[%c0, %c0_0] : memref<16x128xf32, #tpu.memory_space<vmem>>, vector<16x128xf32>
    %1 = arith.mulf %0, %0 : vector<16x128xf32>
    %cst = arith.constant dense<0.000000e+00> : vector<16xf32>
    %2 = vector.multi_reduction <add>, %1, %cst [1] : vector<16x128xf32> to vector<16xf32>
    %3 = vector.shape_cast %2 : vector<16xf32> to vector<16x1xf32>
    %cst_1 = arith.constant 1.280000e+02 : f32
    %4 = vector.broadcast %cst_1 : f32 to vector<16x1xf32>
    %5 = arith.divf %3, %4 : vector<16x1xf32>
    %cst_2 = arith.constant 9.99999997E-7 : f32
    %6 = vector.broadcast %cst_2 : f32 to vector<16x1xf32>
    %7 = arith.addf %5, %6 : vector<16x1xf32>
    %8 = math.rsqrt %7 : vector<16x1xf32>
    %9 = vector.broadcast %8 : vector<16x1xf32> to vector<16x128xf32>
    %10 = arith.mulf %0, %9 : vector<16x128xf32>
    %c0_3 = arith.constant 0 : index
    %c0_4 = arith.constant 0 : index
    %11 = vector.load %arg2[%c0_3, %c0_4] : memref<1x128xf32, #tpu.memory_space<vmem>>, vector<1x128xf32>
    %12 = vector.broadcast %11 : vector<1x128xf32> to vector<16x128xf32>
    %13 = arith.mulf %10, %12 : vector<16x128xf32>
    %14 = arith.truncf %13 : vector<16x128xf32> to vector<16x128xbf16>
    %c0_5 = arith.constant 0 : index
    %c0_6 = arith.constant 0 : index
    %15 = vector.load %arg3[%c0_5, %c0_6] : memref<16x128xbf16, #tpu.memory_space<vmem>>, vector<16x128xbf16>
    tpu.vector_store %arg3[%c0_5, %c0_6], %14 {strides = array<i32>} : memref<16x128xbf16, #tpu.memory_space<vmem>>, vector<16x128xbf16>,
    return
  }
  func.func @transform_0(%arg0: i32) -> (i32, i32) {
    %c0_i32 = arith.constant 0 : i32
    %c0_i32_0 = arith.constant 0 : i32
    return %arg0, %c0_i32 : i32, i32
  }
  func.func @transform_1(%arg0: i32) -> (i32, i32) {
    %c0_i32 = arith.constant 0 : i32
    %c0_i32_0 = arith.constant 0 : i32
    %c0_i32_1 = arith.constant 0 : i32
    return %c0_i32, %c0_i32_0 : i32, i32
  }
  func.func @transform_2(%arg0: i32) -> (i32, i32) {
    %c0_i32 = arith.constant 0 : i32
    %c0_i32_0 = arith.constant 0 : i32
    return %arg0, %c0_i32 : i32, i32
  }
}

</mosaic_0001>

<llo_original>
// kernel: tpu_custom_call.1
$region0: #{tpu_custom_call.1}
  #allocation0 [shape = 'u32[]', space=smem, size = 0x4, offset = 0x4, fixed_abs, tag = 'smem constant byte address 0x4 - core index']
  #allocation1 [shape = 'u32[144,128]{1,0:T(1,128)}', space=vmem, size = 0x12000, scoped, tag = 'internal scratch']
  %s0 = inlined_call_operand.hbm [shape: f32[16,128], index: 0, kind: input, shape index: {}]
  %s1 = inlined_call_operand.vmem [shape: f32[1,128], index: 1, kind: input, shape index: {}]
  %s2 = inlined_call_operand.hbm [shape: bf16[16,128], index: 2, kind: output, shape index: {}]
  %s3 = sld [smem:[#allocation0]]
  $region22: #{tpu_custom_call.1} parent=0
    _
  %s5 = ssub.s32 1, %s3
  %s6 = scalar_select 0, %s5, %s3
  $region1: #{tpu_custom_call.1} parent=0
    #allocation2 [shape = 'u8[8192]{0}', space=vmem, size = 0x2000, scoped, tag = 'input window, operand 0, single buffered']
    #allocation3 [shape = 's32[1]{0}', space=sflag, size = 0x4, scoped, tag = 'scoped memory for tpu_custom_call.1']
    #allocation4 [shape = 's32[1]{0}', space=sflag, size = 0x4, scoped, tag = 'scoped memory for tpu_custom_call.1']
    #allocation5 [shape = 'u8[4096]{0}', space=vmem, size = 0x1000, scoped, tag = 'output window, operand 0, single buffered']
    %7 = vsyncpa [#allocation3], 0
    %8 = vsyncpa [#allocation4], 0
    // Predicated region
    $region2: #{tpu_custom_call.1} parent=1 // pred_check
      _
    $region3: #{tpu_custom_call.1} parent=1 // pred_check_branch
      %10 = sbr.rel (0) target = $region5
    $region4: #{tpu_custom_call.1} parent=1 // pred_region
      %s12 = ssub.s32 256, 256
      %13 = vsyncadd [#allocation3], %s12
      %s14 = sshll.u32 [#allocation2], 4
      %s15 = int_to_ptr.vmem [resolvable:$true] %s14
      %20 = dma.hbm_to_vmem [thread:$0]  %s0, 256, %s15, [#allocation3], 128, 128, 8
    $region5: #{tpu_custom_call.1} parent=1 // pred_fallthru
      _
    // Predicated region
    $region6: #{tpu_custom_call.1} parent=1 // pred_check
      _
    $region7: #{tpu_custom_call.1} parent=1 // pred_check_branch
      %22 = sbr.rel (0) target = $region9
    $region8: #{tpu_custom_call.1} parent=1 // pred_region
      _
    $region9: #{tpu_custom_call.1} parent=1 // pred_fallthru
      _
    // Predicated region
    $region10: #{tpu_custom_call.1} parent=1 // pred_check
      _
    $region11: #{tpu_custom_call.1} parent=1 // pred_check_branch
      %24 = sbr.rel (0) target = $region13
    $region12: #{tpu_custom_call.1} parent=1 // pred_region
      %25 = dma.done [#allocation3], 256
    $region13: #{tpu_custom_call.1} parent=1 // pred_fallthru
      _
    %v26 = vld [vmem:[#allocation2] sm:$0xff]
    %v27 = vld [vmem:[#allocation2 + $0x8] sm:$0xff]
    %v28 = vmul.f32 %v26, %v26
    %v29 = vmul.f32 %v27, %v27
    %30 = vadd.xlane.f32.xlu0 %v28
    %v31 = vpop.xlane.xlu0 %30
    %32 = vadd.xlane.f32.xlu0 %v29
    %v33 = vpop.xlane.xlu0 %32
    %v34 = vrcp.pop 128.0
    %v35 = vmul.f32 %v31, %v34
    %v36 = vmul.f32 %v33, %v34
    %v37 = vadd.f32 %v35, 1e-06
    %v38 = vadd.f32 %v36, 1e-06
    %v39 = vrsqrt.pop %v37
    %v40 = vrsqrt.pop %v38
    %v41 = vmul.f32 %v26, %v39
    %v42 = vmul.f32 %v27, %v40
    %v43 = vld [vmem:[%s1] sm:$0x1]
    %v45 = vlaneseq
    %v46 = vshrl.u32 %v45, 7
    %v47 = vsub.s32 0, %v46
    %v48 = vrot.slane %v43, %v47
    %v50 = vmul.f32 %v41, %v48
    %v51 = vmul.f32 %v42, %v48
    %v52 = vpack.c.bf16 %v51, %v50
    %v54 = vunpack.c.l.b16 %v52
    %v55 = vunpack.c.h.b16 %v52
    %v56 = vpack.c.b16 %v54, %v54
    %v57 = vpack.c.b16 %v55, %v55
    %60 = vst [vmem:[#allocation5] sm:$0xf] %v56
    %61 = vst [vmem:[#allocation5 + $0x4] sm:$0xf] %v57
    // Predicated region
    $region14: #{tpu_custom_call.1} parent=1 // pred_check
      _
    $region15: #{tpu_custom_call.1} parent=1 // pred_check_branch
      %63 = sbr.rel (0) target = $region17
    $region16: #{tpu_custom_call.1} parent=1 // pred_region
      %s65 = ssub.s32 128, 128
      %66 = vsyncadd [#allocation4], %s65
      %s67 = sshll.u32 [#allocation5], 4
      %s68 = int_to_ptr.vmem [resolvable:$true] %s67
      %73 = dma.vmem_to_hbm [thread:$0]  %s68, 128, %s2, [#allocation4], 64, 64, 4
    $region17: #{tpu_custom_call.1} parent=1 // pred_fallthru
      _
    // Predicated region
    $region18: #{tpu_custom_call.1} parent=1 // pred_check
      _
    $region19: #{tpu_custom_call.1} parent=1 // pred_check_branch
      %75 = sbr.rel (0) target = $region21
    $region20: #{tpu_custom_call.1} parent=1 // pred_region
      %76 = dma.done [#allocation4], 128
    $region21: #{tpu_custom_call.1} parent=1 // pred_fallthru
      _
    %77 = vsyncpa [#allocation3], 1
    %78 = vsyncpa [#allocation4], 1

</llo_original>
